<compile_context>
chip_gen: v7x
topology: tpu7x:2x2x1
jax: 0.10.0
libtpu: 0.0.40
codegen_flags: <defaults>
</compile_context>

<pallas_src>
import functools
import numpy as np
import jax
import jax.numpy as jnp
from jax.experimental import pallas as pl
from jax.experimental.pallas import tpu as pltpu


# ------------------------- small helpers -------------------------

def _round_up(x, m):
    return (x + m - 1) // m * m


def _rp128(c):
    return _round_up(c, 128)


def _check_buffered():
    try:
        pl.BlockSpec((8, 128), lambda i: (i, 0), pipeline_mode=pl.Buffered(3))
        return True
    except Exception:
        return False


_HAS_BUFFERED = _check_buffered()


@functools.lru_cache(maxsize=None)
def _device_cfg():
    """Returns (vmem tile budget, vmem_limit_bytes, preferred tm) per TPU generation."""
    try:
        kind = jax.devices()[0].device_kind.lower()
    except Exception:
        kind = ""
    if ("v5 lite" in kind) or ("v5e" in kind) or ("v5lite" in kind):
        # v5e: 128 MiB VMEM, 128-wide MXUs -> keep tm=128, spend VMEM on tk/tn.
        return (48 << 20, 88 << 20, 128)
    if "v6" in kind:
        # v6e: 128 MiB VMEM, 256-wide MXUs -> big tiles, single-pass X streaming.
        return (48 << 20, 88 << 20, 256)
    if "v7" in kind:
        # v7x: 64 MiB VMEM per TensorCore -> tighter budget, keep 2 parallel blocks.
        return (22 << 20, 44 << 20, 256)
    # unknown / older parts: conservative, previously-validated settings.
    return (20 << 20, 40 << 20, 256)


def _divisors128(x):
    """Multiples of 128 that exactly divide x (x itself a multiple of 128), desc."""
    n = x // 128
    return sorted((128 * d for d in range(1, n + 1) if n % d == 0), reverse=True)


def _pick_tiles(M, Kp, Np, has_res):
    """Choose (Mp, tm, tk, tn, buffered) for the fused matmul. Kp/Np are /128."""
    budget, _, tm_pref = _device_cfg()
    if M >= tm_pref:
        tm = tm_pref
        Mp = _round_up(M, tm)
    elif M >= 128:
        tm = 128
        Mp = _round_up(M, 128)
    else:
        Mp = _round_up(M, 16)               # bf16 vregs pack 16 sublanes
        tm = Mp
    small_m = (Mp // tm) == 1
    wbuf = 3 if (small_m and _HAS_BUFFERED) else 2

    def tile_bytes(tk, tn):
        b = (2 * tm * tk * 2) + (wbuf * tk * tn * 2) + (2 * tm * tn * 2) \
            + (tm * tn * 4) + (2 * tn * 4)
        if has_res:
            b += 2 * tm * tn * 2
        return b

    tn_cands = _divisors128(Np)
    # Keep >=2 parallel (i, j) blocks so both v7x TensorCores get work
    # (costs almost nothing on single-TC v5e/v6e: small-M X re-reads are tiny).
    if small_m and Np >= 256:
        tn_cands = [c for c in tn_cands if c < Np]
    tn = next((c for c in tn_cands if tile_bytes(128, c) <= budget), tn_cands[-1])
    tk_cands = _divisors128(Kp)
    tk = next((c for c in tk_cands if tile_bytes(c, tn) <= budget), tk_cands[-1])
    buffered = bool(small_m and _HAS_BUFFERED and (Kp // tk) * (Np // tn) >= 3)
    return Mp, tm, tk, tn, buffered


# ------------------------- Pallas kernels -------------------------

def _mm_kernel(x_ref, w_ref, t_ref, o_ref, acc_ref, *, relu):
    @pl.when(pl.program_id(2) == 0)
    def _():
        acc_ref[...] = jnp.zeros_like(acc_ref)

    acc_ref[...] += jnp.dot(x_ref[...], w_ref[...], preferred_element_type=jnp.float32)

    @pl.when(pl.program_id(2) == pl.num_programs(2) - 1)
    def _():
        out = acc_ref[...] + t_ref[...]
        if relu:
            out = jnp.maximum(out, 0.0)
        o_ref[...] = out.astype(o_ref.dtype)


def _mm_res_kernel(x_ref, w_ref, t_ref, r_ref, o_ref, acc_ref, *, relu):
    @pl.when(pl.program_id(2) == 0)
    def _():
        acc_ref[...] = jnp.zeros_like(acc_ref)

    acc_ref[...] += jnp.dot(x_ref[...], w_ref[...], preferred_element_type=jnp.float32)

    @pl.when(pl.program_id(2) == pl.num_programs(2) - 1)
    def _():
        out = acc_ref[...] + t_ref[...] + r_ref[...].astype(jnp.float32)
        if relu:
            out = jnp.maximum(out, 0.0)
        o_ref[...] = out.astype(o_ref.dtype)


@functools.lru_cache(maxsize=None)
def _get_matmul_call(Mp, Kp, Np, tm, tk, tn, relu, has_res, buffered):
    _, vmem_limit, _ = _device_cfg()
    if buffered and _HAS_BUFFERED:
        # Deeper weight buffering for small-M layers that stream many weight blocks.
        w_spec = pl.BlockSpec((tk, tn), lambda i, j, k: (k, j),
                              pipeline_mode=pl.Buffered(3))
    else:
        w_spec = pl.BlockSpec((tk, tn), lambda i, j, k: (k, j))
    in_specs = [
        pl.BlockSpec((tm, tk), lambda i, j, k: (i, k)),     # x (bf16)
        w_spec,                                             # packed weight (bf16)
        pl.BlockSpec((1, tn), lambda i, j, k: (0, j)),      # shift (f32)
    ]
    if has_res:
        in_specs.append(pl.BlockSpec((tm, tn), lambda i, j, k: (i, j)))   # residual
        kernel = functools.partial(_mm_res_kernel, relu=relu)
    else:
        kernel = functools.partial(_mm_kernel, relu=relu)
    bytes_accessed = (Mp * Kp + Kp * Np + Mp * Np) * 2 + Np * 4
    if has_res:
        bytes_accessed += Mp * Np * 2
    cost = pl.CostEstimate(flops=2 * Mp * Kp * Np, transcendentals=0,
                           bytes_accessed=bytes_accessed)
    return pl.pallas_call(
        kernel,
        out_shape=jax.ShapeDtypeStruct((Mp, Np), jnp.bfloat16),
        grid_spec=pltpu.PrefetchScalarGridSpec(
            num_scalar_prefetch=0,
            grid=(Mp // tm, Np // tn, Kp // tk),
            in_specs=in_specs,
            out_specs=pl.BlockSpec((tm, tn), lambda i, j, k: (i, j)),
            scratch_shapes=[pltpu.VMEM((tm, tn), jnp.float32)],
        ),
        compiler_params=pltpu.CompilerParams(
            dimension_semantics=("parallel", "parallel", "arbitrary"),
            vmem_limit_bytes=vmem_limit,
        ),
        cost_estimate=cost,
    )


def _maxpool_kernel(s0, s1, s2, s3, s4, s5, s6, s7, s8, o_ref):
    out = s0[...]
    for r in (s1, s2, s3, s4, s5, s6, s7, s8):
        out = jnp.maximum(out, r[...])
    o_ref[...] = out


# ------------------------- packed params -------------------------

@jax.tree_util.register_pytree_node_class
class PackedLinear:
    """Pre-packed weight for the fused matmul: W transposed to (K, N), BN scale
    folded into columns, zero rows inserted to match the channel-padded activation
    layout, padded to (Kp, Np) and cast to bf16; `t` is the folded bias/BN shift
    padded to (1, Np) in f32.  `k` is the K the incoming patch matrix must have,
    `n` the number of meaningful output columns."""

    def __init__(self, w, t, k, n):
        self.w, self.t, self.k, self.n = w, t, k, n

    def tree_flatten(self):
        return (self.w, self.t), (self.k, self.n)

    @classmethod
    def tree_unflatten(cls, aux, children):
        w, t = children
        return cls(w, t, *aux)


def bn_fold(bn, bias=None, eps=1e-5):
    s = bn['gamma'] / jnp.sqrt(bn['var'] + eps)
    t = bn['beta'] - bn['mean'] * s
    if bias is not None:
        t = t + bias * s
    return s, t


def _pack_matmul(wm, scale, shift):
    K, N = wm.shape
    Kp, Np = _rp128(K), _rp128(N)
    wp = jnp.pad(wm * scale[None, :], ((0, Kp - K), (0, Np - N))).astype(jnp.bfloat16)
    tp = jnp.pad(shift, (0, Np - N)).reshape(1, Np).astype(jnp.float32)
    return PackedLinear(wp, tp, K, N)


def pack_conv(w, bn=None, bias=None, in_segments=None, eps=1e-5):
    """w is PyTorch (Cout, Cin, kH, kW).  `in_segments` is a list of
    (real_channels, carried_channels) describing the channel-padded layout of the
    incoming NHWC activation; zero rows are inserted so K matches that layout."""
    cout, cin, kh, kw = w.shape
    if bn is not None:
        s, t = bn_fold(bn, bias, eps)
    else:
        s = jnp.ones((cout,), jnp.float32)
        t = bias if bias is not None else jnp.zeros((cout,), jnp.float32)
    if in_segments is None:
        in_segments = [(cin, cin)]
    wt = jnp.transpose(w, (2, 3, 1, 0))                      # (kh, kw, cin, cout)
    parts, off = [], 0
    for real, carried in in_segments:
        seg = wt[:, :, off:off + real, :]
        if carried > real:
            seg = jnp.pad(seg, ((0, 0), (0, 0), (0, carried - real), (0, 0)))
        parts.append(seg)
        off += real
    assert off == cin, (off, cin)
    wt = parts[0] if len(parts) == 1 else jnp.concatenate(parts, axis=2)
    wm = wt.reshape(kh * kw * wt.shape[2], cout)
    return _pack_matmul(wm, s, t)


def pack_deconv2x2(w, bn, bias, cin_carried=None, eps=1e-5):
    """nn.ConvTranspose2d(k=2, s=2); w is PyTorch (Cin, Cout, 2, 2).  Columns are
    ordered (ki, kj, cout) so the depth-to-space after the matmul keeps cout minor."""
    cin, cout = w.shape[0], w.shape[1]
    s, t = bn_fold(bn, bias, eps)
    wm = jnp.transpose(w, (0, 2, 3, 1)).reshape(cin, 4 * cout)
    if cin_carried is not None and cin_carried > cin:
        wm = jnp.pad(wm, ((0, cin_carried - cin), (0, 0)))
    return _pack_matmul(wm, jnp.tile(s, 4), jnp.tile(t, 4))


# ------------------------- fused matmul / conv wrappers -------------------------

def fused_matmul(x, pc, residual=None, relu=True):
    """relu((x @ W_packed) + shift [+ residual]); bf16 MXU operands, f32 accumulation.
    Returns all Np (channel-padded) columns; padded columns are exact zeros."""
    M, K = x.shape
    assert K == pc.k, (K, pc.k)
    Kp, Np = pc.w.shape
    has_res = residual is not None
    Mp, tm, tk, tn, buffered = _pick_tiles(M, Kp, Np, has_res)
    xp = x.astype(jnp.bfloat16)
    if Mp > M or Kp > K:
        xp = jnp.pad(xp, ((0, Mp - M), (0, Kp - K)))
    if has_res:
        rp = residual.astype(jnp.bfloat16)
        assert rp.shape[1] == Np, (rp.shape, Np)
        if Mp > M:
            rp = jnp.pad(rp, ((0, Mp - M), (0, 0)))
        out = _get_matmul_call(Mp, Kp, Np, tm, tk, tn, bool(relu), True, buffered)(
            xp, pc.w, pc.t, rp)
    else:
        out = _get_matmul_call(Mp, Kp, Np, tm, tk, tn, bool(relu), False, buffered)(
            xp, pc.w, pc.t)
    return out if Mp == M else out[:M]


def conv2d(x, pc, *, kh=1, kw=None, stride=1, pad=0, residual=None, relu=True):
    """NHWC conv via im2col + fused Pallas matmul on a pre-packed weight.  The
    activation carries 128-padded channels; the packed weight already contains the
    matching zero rows so no per-layer channel pad/slice copies are generated."""
    if kw is None:
        kw = kh
    N, H, W, C = x.shape
    Ho = (H + 2 * pad - kh) // stride + 1
    Wo = (W + 2 * pad - kw) // stride + 1
    if kh == 1 and kw == 1 and pad == 0:
        patches = (x if stride == 1 else x[:, ::stride, ::stride, :]).reshape(-1, C)
    else:
        # TODO(synk): im2col is XLA glue (9x activation expansion for 3x3, 49x for the
        # stem); fold the window gather into the kernel's K grid axis (manual halo DMA)
        # to remove the patch-matrix HBM round trip at large CXR resolutions.
        xp = jnp.pad(x, ((0, 0), (pad, pad), (pad, pad), (0, 0)))
        cols = []
        for ki in range(kh):
            for kj in range(kw):
                cols.append(xp[:, ki:ki + (Ho - 1) * stride + 1:stride,
                                  kj:kj + (Wo - 1) * stride + 1:stride, :])
        patches = jnp.concatenate(cols, axis=-1).reshape(-1, kh * kw * C)
    res = residual.reshape(-1, residual.shape[-1]) if residual is not None else None
    out = fused_matmul(patches, pc, residual=res, relu=relu)
    return out.reshape(N, Ho, Wo, out.shape[-1])


def conv_transpose2x2(x, pc, relu=True):
    """nn.ConvTranspose2d(k=2, s=2, p=0) via the fused matmul.  Packed columns are
    (ki, kj, cout)-ordered so the depth-to-space keeps cout as the minor dim."""
    N, H, W, Cin = x.shape
    cout = pc.n // 4
    y = fused_matmul(x.reshape(-1, Cin), pc, relu=relu)
    if y.shape[-1] != pc.n:
        y = y[:, :pc.n]
    y = y.reshape(N, H, W, 2, 2, cout)
    y = jnp.transpose(y, (0, 1, 3, 2, 4, 5)).reshape(N, 2 * H, 2 * W, cout)
    return y


def maxpool_3x3_s2_p1(x):
    """nn.MaxPool2d(3, stride=2, padding=1) on NHWC input: 9-way max fold, tiled over
    rows.  Channels are already carried 128-padded so the kernel is lane-dense."""
    # TODO(synk): fold the 3x3/stride-2 window gather into the kernel (manual halo DMA)
    # instead of materializing 9 strided slices in XLA.
    N, H, W, C = x.shape
    Ho, Wo = (H + 2 - 3) // 2 + 1, (W + 2 - 3) // 2 + 1
    neg = float(jnp.finfo(x.dtype).min)
    xp = jnp.pad(x, ((0, 0), (1, 1), (1, 1), (0, 0)), constant_values=neg)
    M = N * Ho * Wo
    Cp = _rp128(C)
    Mp = _round_up(M, 16)
    tm = next(c for c in (1024, 512, 256, 128, 64, 32, 16) if Mp % c == 0)
    slices = []
    for ki in range(3):
        for kj in range(3):
            s = xp[:, ki:ki + 2 * (Ho - 1) + 1:2, kj:kj + 2 * (Wo - 1) + 1:2, :]
            s = s.reshape(M, C)
            if Mp > M or Cp > C:
                s = jnp.pad(s, ((0, Mp - M), (0, Cp - C)), constant_values=neg)
            slices.append(s)
    out = pl.pallas_call(
        _maxpool_kernel,
        out_shape=jax.ShapeDtypeStruct((Mp, Cp), x.dtype),
        grid_spec=pltpu.PrefetchScalarGridSpec(
            num_scalar_prefetch=0,
            grid=(Mp // tm,),
            in_specs=[pl.BlockSpec((tm, Cp), lambda i: (i, 0)) for _ in range(9)],
            out_specs=pl.BlockSpec((tm, Cp), lambda i: (i, 0)),
        ),
        compiler_params=pltpu.CompilerParams(dimension_semantics=("parallel",)),
    )(*slices)
    if Mp > M or Cp > C:
        out = out[:M, :C]
    return out.reshape(N, Ho, Wo, C)


# ------------------------- parameters (deterministic, synthetic) -------------------------

class KeyGen:
    def __init__(self, seed):
        self.key = jax.random.PRNGKey(seed)
        self.i = 0

    def __call__(self):
        self.i += 1
        return jax.random.fold_in(self.key, self.i)


def conv_w(kg, cout, cin, kh, kw):
    fan_in = cin * kh * kw
    return jax.random.normal(kg(), (cout, cin, kh, kw), jnp.float32) * np.sqrt(2.0 / fan_in)


def bn_params(kg, c):
    return dict(
        gamma=1.0 + 0.1 * jax.random.normal(kg(), (c,), jnp.float32),
        beta=0.1 * jax.random.normal(kg(), (c,), jnp.float32),
        mean=0.1 * jax.random.normal(kg(), (c,), jnp.float32),
        var=1.0 + 0.1 * jax.random.uniform(kg(), (c,), jnp.float32),
    )


def make_bottleneck_params(kg, inplanes, planes, need_down):
    p = dict(
        conv1_w=conv_w(kg, planes, inplanes, 1, 1),
        bn1=bn_params(kg, planes),
        conv2_w=conv_w(kg, planes, planes, 3, 3),
        bn2=bn_params(kg, planes),
        conv3_w=conv_w(kg, planes * 4, planes, 1, 1),
        bn3=bn_params(kg, planes * 4),
    )
    if need_down:
        p['down_w'] = conv_w(kg, planes * 4, inplanes, 1, 1)
        p['down_bn'] = bn_params(kg, planes * 4)
    return p


def make_reslayer_params(kg, inplanes, planes, blocks, stride):
    ps = []
    for i in range(blocks):
        inp = inplanes if i == 0 else planes * 4
        need_down = (i == 0) and (stride != 1 or inplanes != planes * 4)
        ps.append(make_bottleneck_params(kg, inp, planes, need_down))
    return ps


def make_uplayer_params(kg, inplanes, planes, blocks, expansion=4):
    inp, pln = inplanes * expansion, planes * expansion
    up = dict(
        up_w=jax.random.normal(kg(), (inp, pln, 2, 2), jnp.float32) * np.sqrt(2.0 / inp),
        up_b=0.1 * jax.random.normal(kg(), (pln,), jnp.float32),
        bn1=bn_params(kg, pln),
        conv1_w=conv_w(kg, pln, inp, 3, 3),
        bn2=bn_params(kg, pln),
    )
    blks = [make_bottleneck_params(kg, pln, planes, need_down=False) for _ in range(1, blocks)]
    return dict(up=up, blocks=blks)


def build_params(seed=0):
    kg = KeyGen(seed)
    P = {}
    # ResNet50 backbone (cut at 8): conv1, bn1, relu, maxpool, layer1..layer4
    P['conv1_w'] = conv_w(kg, 64, 3, 7, 7)
    P['bn1'] = bn_params(kg, 64)
    P['layer1'] = make_reslayer_params(kg, 64, 64, 3, 1)
    P['layer2'] = make_reslayer_params(kg, 256, 128, 4, 2)
    P['layer3'] = make_reslayer_params(kg, 512, 256, 6, 2)
    P['layer4'] = make_reslayer_params(kg, 1024, 512, 3, 2)
    # decoder head
    P['up_layer1'] = make_uplayer_params(kg, 512, 256, 6)
    P['up_layer2'] = make_uplayer_params(kg, 256, 128, 4)
    P['up_layer3'] = make_uplayer_params(kg, 128, 64, 3)
    P['map_w'] = conv_w(kg, 64, 256, 3, 3)
    P['conv_w'] = conv_w(kg, 64, 128, 3, 3)
    P['bn_conv'] = bn_params(kg, 64)
    P['up_conv_w'] = jax.random.normal(kg(), (64, 1, 2, 2), jnp.float32) * np.sqrt(2.0 / 64)
    P['up_conv_b'] = 0.1 * jax.random.normal(kg(), (1,), jnp.float32)
    P['bn_up'] = bn_params(kg, 1)
    return P


# ------------------------- one-time weight packing (outside jit) -------------------------

def pack_bottleneck(p, cin_carried):
    planes, inplanes = p['conv1_w'].shape[0], p['conv1_w'].shape[1]
    pc = _rp128(planes)
    q = dict(
        conv1=pack_conv(p['conv1_w'], p['bn1'], in_segments=[(inplanes, cin_carried)]),
        conv2=pack_conv(p['conv2_w'], p['bn2'], in_segments=[(planes, pc)]),
        conv3=pack_conv(p['conv3_w'], p['bn3'], in_segments=[(planes, pc)]),
    )
    if 'down_w' in p:
        q['down'] = pack_conv(p['down_w'], p['down_bn'],
                              in_segments=[(inplanes, cin_carried)])
    return q


def pack_reslayer(ps, cin_carried):
    out = []
    for p in ps:
        out.append(pack_bottleneck(p, cin_carried))
        cin_carried = _rp128(p['conv3_w'].shape[0])
    return out, cin_carried


def pack_uplayer(p, cin_u):
    up = p['up']
    pln = up['up_w'].shape[1]                                # planes * expansion
    q = dict(
        up=dict(
            upconv=pack_deconv2x2(up['up_w'], up['bn1'], up['up_b'], cin_carried=cin_u),
            conv1=pack_conv(up['conv1_w'], up['bn2'],
                            in_segments=[(pln, _rp128(pln)), (pln, _rp128(pln))]),
        ),
        blocks=[pack_bottleneck(b, _rp128(pln)) for b in p['blocks']],
    )
    return q, _rp128(pln)


def pack_params(P):
    packed = dict(conv1=pack_conv(P['conv1_w'], P['bn1'], in_segments=[(3, 3)]))
    c = _rp128(64)                                           # stem output carried width
    packed['layer1'], c = pack_reslayer(P['layer1'], c)
    packed['layer2'], c = pack_reslayer(P['layer2'], c)
    packed['layer3'], c = pack_reslayer(P['layer3'], c)
    packed['layer4'], c = pack_reslayer(P['layer4'], c)
    packed['up_layer1'], c = pack_uplayer(P['up_layer1'], c)
    packed['up_layer2'], c = pack_uplayer(P['up_layer2'], c)
    packed['up_layer3'], c = pack_uplayer(P['up_layer3'], c)
    packed['map'] = pack_conv(P['map_w'], in_segments=[(256, c)])  # plain conv3x3
    packed['conv'] = pack_conv(P['conv_w'], P['bn_conv'],
                               in_segments=[(64, _rp128(64)), (64, _rp128(64))])
    packed['up_conv'] = pack_deconv2x2(P['up_conv_w'], P['bn_up'], P['up_conv_b'],
                                       cin_carried=_rp128(64))
    return packed


# ------------------------- forward -------------------------

def bottleneck_fwd(p, x, stride=1):
    identity = x
    out = conv2d(x, p['conv1'], kh=1, relu=True)
    out = conv2d(out, p['conv2'], kh=3, stride=stride, pad=1, relu=True)
    if 'down' in p:
        identity = conv2d(x, p['down'], kh=1, stride=stride, relu=False)
    out = conv2d(out, p['conv3'], kh=1, residual=identity, relu=True)
    return out


def reslayer_fwd(ps, x, stride):
    for i, p in enumerate(ps):
        x = bottleneck_fwd(p, x, stride if i == 0 else 1)
    return x


def upblock_fwd(p, u, xskip):
    up = conv_transpose2x2(u, p['upconv'], relu=True)        # relu(bn1(upconv(u)))
    out = jnp.concatenate([xskip, up], axis=-1)               # torch.cat([x, up], dim=1)
    out = conv2d(out, p['conv1'], kh=3, pad=1, relu=True)
    return out


def uplayer_fwd(p, u, xskip):
    x = upblock_fwd(p['up'], u, xskip)
    for bp in p['blocks']:
        x = bottleneck_fwd(bp, x, 1)
    return x


def unet_forward(params, x_nchw):
    x = jnp.transpose(x_nchw, (0, 2, 3, 1)).astype(jnp.bfloat16)   # NCHW -> NHWC, bf16
    # backbone stem: conv7x7/s2 + bn + relu (hook sfs[0]), then maxpool
    x = conv2d(x, params['conv1'], kh=7, stride=2, pad=3, relu=True)
    feat0 = x
    x = maxpool_3x3_s2_p1(x)
    x = reslayer_fwd(params['layer1'], x, 1); feat1 = x             # sfs[1]
    x = reslayer_fwd(params['layer2'], x, 2); feat2 = x             # sfs[2]
    x = reslayer_fwd(params['layer3'], x, 2); feat3 = x             # sfs[3]
    x = reslayer_fwd(params['layer4'], x, 2)
    # F.relu(backbone(x)): layer4 already ends in ReLU, so the extra relu is a no-op.
    x = uplayer_fwd(params['up_layer1'], x, feat3)
    x = uplayer_fwd(params['up_layer2'], x, feat2)
    x = uplayer_fwd(params['up_layer3'], x, feat1)
    # self.map: plain conv3x3 (no bias, no bn, no relu)
    x = conv2d(x, params['map'], kh=3, pad=1, relu=False)
    # F.interpolate(scale_factor=2), default mode='nearest'
    x = jnp.repeat(jnp.repeat(x, 2, axis=1), 2, axis=2)
    x = jnp.concatenate([feat0, x], axis=-1)                        # cat([sfs[0], x], dim=1)
    x = conv2d(x, params['conv'], kh=3, pad=1, relu=True)
    x = conv_transpose2x2(x, params['up_conv'], relu=True)          # relu(bn_up(up_conv(x)))
    return jnp.transpose(x, (0, 3, 1, 2)).astype(jnp.float32)       # back to NCHW


# ------------------------- main -------------------------

if __name__ == "__main__":
    # 1) fused matmul kernel check (bf16 operands, f32 acc; exercises M/K/N padding).
    kt = jax.random.PRNGKey(42)
    a = jax.random.normal(kt, (70, 200), jnp.float32)
    b = jax.random.normal(jax.random.fold_in(kt, 1), (200, 70), jnp.float32)
    s = jax.random.normal(jax.random.fold_in(kt, 2), (70,), jnp.float32)
    t = jax.random.normal(jax.random.fold_in(kt, 3), (70,), jnp.float32)
    pc = _pack_matmul(b, s, t)
    got_full = fused_matmul(a, pc, relu=True).astype(jnp.float32)
    got = got_full[:, :70]
    ref = jnp.maximum(
        a.astype(jnp.bfloat16).astype(jnp.float32)
        @ pc.w[:200, :70].astype(jnp.float32) + t, 0.0)
    assert jnp.allclose(got, ref, rtol=2e-2, atol=2e-2), "fused matmul mismatch"
    assert bool(jnp.all(got_full[:, 70:] == 0.0)), "padded output columns not zero"
    # 2) BN/scale folding check against the f32 reference (bf16 rounding tolerance).
    assert jnp.allclose(pc.w[:200, :70].astype(jnp.float32), b * s[None, :],
                        rtol=8e-3, atol=8e-3), "scale fold mismatch"

    # 3) full forward pass at small shapes.
    params = build_params(seed=0)
    packed = pack_params(params)                 # one-time weight packing, outside jit
    key = jax.random.PRNGKey(0)
    x = jax.random.normal(key, (2, 3, 32, 32), jnp.float32)   # NCHW input, like PyTorch
    fwd = jax.jit(unet_forward)
    y = jax.block_until_ready(fwd(packed, x))
    assert y.shape == (2, 1, 32, 32), y.shape
    assert bool(jnp.all(jnp.isfinite(y)))
    print("KERNEL_OK")
</pallas_src>

<mosaic_0001>
module attributes {stable_mosaic.version = 11 : i64} {
  func.func @_mm_kernel(%arg0: i32, %arg1: i32, %arg2: i32, %arg3: memref<80x256xbf16, #tpu.memory_space<vmem>>, %arg4: memref<256x128xbf16, #tpu.memory_space<vmem>>, %arg5: memref<1x128xf32, #tpu.memory_space<vmem>>, %arg6: memref<80x128xbf16, #tpu.memory_space<vmem>>, %arg7: memref<80x128xf32, #tpu.memory_space<vmem>>) attributes {dimension_semantics = [#tpu.dimension_semantics<parallel>, #tpu.dimension_semantics<parallel>, #tpu.dimension_semantics<arbitrary>], iteration_bounds = array<i64: 1, 1, 1>, scalar_prefetch = 0 : i64, scratch_operands = 1 : i64, tpu.core_type = #tpu.core_type<tc>, window_params = [{transform_indices = @transform_0, window_bounds = array<i64: 80, 256>}, {transform_indices = @transform_1, window_bounds = array<i64: 256, 128>}, {transform_indices = @transform_2, window_bounds = array<i64: 1, 128>}, {transform_indices = @transform_3, window_bounds = array<i64: 80, 128>}]} {
    %c0_i32 = arith.constant 0 : i32
    %0 = arith.cmpi eq, %arg2, %c0_i32 : i32
    %1 = arith.extui %0 : i1 to i32
    %c0_i32_0 = arith.constant 0 : i32
    %2 = arith.cmpi ne, %1, %c0_i32_0 : i32
    scf.if %2 {
      %cst_10 = arith.constant 0.000000e+00 : f32
      %12 = vector.broadcast %cst_10 : f32 to vector<80x128xf32>
      %c0_11 = arith.constant 0 : index
      %c0_12 = arith.constant 0 : index
      %13 = vector.load %arg7[%c0_11, %c0_12] : memref<80x128xf32, #tpu.memory_space<vmem>>, vector<80x128xf32>
      tpu.vector_store %arg7[%c0_11, %c0_12], %12 {strides = array<i32>} : memref<80x128xf32, #tpu.memory_space<vmem>>, vector<80x128xf32>,
    } else {
    }
    %c0 = arith.constant 0 : index
    %c0_1 = arith.constant 0 : index
    %3 = vector.load %arg7[%c0, %c0_1] : memref<80x128xf32, #tpu.memory_space<vmem>>, vector<80x128xf32>
    %c0_2 = arith.constant 0 : index
    %c0_3 = arith.constant 0 : index
    %4 = vector.load %arg3[%c0_2, %c0_3] : memref<80x256xbf16, #tpu.memory_space<vmem>>, vector<80x256xbf16>
    %c0_4 = arith.constant 0 : index
    %c0_5 = arith.constant 0 : index
    %5 = vector.load %arg4[%c0_4, %c0_5] : memref<256x128xbf16, #tpu.memory_space<vmem>>, vector<256x128xbf16>
    %cst = arith.constant dense<0.000000e+00> : vector<80x128xf32>
    %6 = tpu.matmul %4, %5, %cst {dimension_numbers = #tpu.dot_dimension_numbers<[1], [0], [0], [1], [0, 0, 1, 1], [], []>} : vector<80x256xbf16>, vector<256x128xbf16>, vector<80x128xf32> -> vector<80x128xf32>
    %7 = arith.addf %3, %6 : vector<80x128xf32>
    %c0_6 = arith.constant 0 : index
    %c0_7 = arith.constant 0 : index
    %8 = vector.load %arg7[%c0_6, %c0_7] : memref<80x128xf32, #tpu.memory_space<vmem>>, vector<80x128xf32>
    tpu.vector_store %arg7[%c0_6, %c0_7], %7 {strides = array<i32>} : memref<80x128xf32, #tpu.memory_space<vmem>>, vector<80x128xf32>,
    %c0_i32_8 = arith.constant 0 : i32
    %9 = arith.cmpi eq, %arg2, %c0_i32_8 : i32
    %10 = arith.extui %9 : i1 to i32
    %c0_i32_9 = arith.constant 0 : i32
    %11 = arith.cmpi ne, %10, %c0_i32_9 : i32
    scf.if %11 {
      %c0_10 = arith.constant 0 : index
      %c0_11 = arith.constant 0 : index
      %12 = vector.load %arg7[%c0_10, %c0_11] : memref<80x128xf32, #tpu.memory_space<vmem>>, vector<80x128xf32>
      %c0_12 = arith.constant 0 : index
      %c0_13 = arith.constant 0 : index
      %13 = vector.load %arg5[%c0_12, %c0_13] : memref<1x128xf32, #tpu.memory_space<vmem>>, vector<1x128xf32>
      %14 = vector.broadcast %13 : vector<1x128xf32> to vector<80x128xf32>
      %15 = arith.addf %12, %14 : vector<80x128xf32>
      %cst_14 = arith.constant 0.000000e+00 : f32
      %16 = vector.broadcast %cst_14 : f32 to vector<80x128xf32>
      %17 = arith.maximumf %15, %16 : vector<80x128xf32>
      %18 = arith.truncf %17 : vector<80x128xf32> to vector<80x128xbf16>
      %c0_15 = arith.constant 0 : index
      %c0_16 = arith.constant 0 : index
      %19 = vector.load %arg6[%c0_15, %c0_16] : memref<80x128xbf16, #tpu.memory_space<vmem>>, vector<80x128xbf16>
      tpu.vector_store %arg6[%c0_15, %c0_16], %18 {strides = array<i32>} : memref<80x128xbf16, #tpu.memory_space<vmem>>, vector<80x128xbf16>,
    } else {
    }
    return
  }
  func.func @transform_0(%arg0: i32, %arg1: i32, %arg2: i32) -> (i32, i32) {
    %c0_i32 = arith.constant 0 : i32
    return %arg0, %arg2 : i32, i32
  }
  func.func @transform_1(%arg0: i32, %arg1: i32, %arg2: i32) -> (i32, i32) {
    %c0_i32 = arith.constant 0 : i32
    return %arg2, %arg1 : i32, i32
  }
  func.func @transform_2(%arg0: i32, %arg1: i32, %arg2: i32) -> (i32, i32) {
    %c0_i32 = arith.constant 0 : i32
    %c0_i32_0 = arith.constant 0 : i32
    return %c0_i32, %arg1 : i32, i32
  }
  func.func @transform_3(%arg0: i32, %arg1: i32, %arg2: i32) -> (i32, i32) {
    %c0_i32 = arith.constant 0 : i32
    return %arg0, %arg1 : i32, i32
  }
}

</mosaic_0001>

<llo_original>
// kernel: tpu_custom_call.1
$region0: #{tpu_custom_call.1}
  #allocation0 [shape = 'u32[]', space=smem, size = 0x4, offset = 0x4, fixed_abs, tag = 'smem constant byte address 0x4 - core index']
  #allocation1 [shape = 'u32[144,128]{1,0:T(1,128)}', space=vmem, size = 0x12000, scoped, tag = 'internal scratch']
  #allocation2 [shape = 'f32[80,128]{1,0:T(8,128)}', space=vmem, size = 0xa000, scoped, tag = 'scratch operand']
  %s0 = inlined_call_operand.hbm [shape: bf16[80,256], index: 0, kind: input, shape index: {}]
  %s1 = inlined_call_operand.hbm [shape: bf16[256,128], index: 1, kind: input, shape index: {}]
  %s2 = inlined_call_operand.vmem [shape: f32[1,128], index: 2, kind: input, shape index: {}]
  %s3 = inlined_call_operand.hbm [shape: bf16[80,128], index: 3, kind: output, shape index: {}]
  %s4 = sld [smem:[#allocation0]]
  $region38: #{tpu_custom_call.1} parent=0
    _
  %s6 = ssub.s32 1, %s4
  %s7 = scalar_select 0, %s6, %s4
  $region1: #{tpu_custom_call.1} parent=0
    #allocation3 [shape = 'u8[40960]{0}', space=vmem, size = 0xa000, scoped, tag = 'input window, operand 0, single buffered']
    #allocation4 [shape = 's32[1]{0}', space=sflag, size = 0x4, scoped, tag = 'scoped memory for tpu_custom_call.1']
    #allocation5 [shape = 's32[1]{0}', space=sflag, size = 0x4, scoped, tag = 'scoped memory for tpu_custom_call.1']
    #allocation6 [shape = 'u8[65536]{0}', space=vmem, size = 0x10000, scoped, tag = 'input window, operand 1, single buffered']
    #allocation7 [shape = 's32[1]{0}', space=sflag, size = 0x4, scoped, tag = 'scoped memory for tpu_custom_call.1']
    #allocation8 [shape = 'u8[20480]{0}', space=vmem, size = 0x5000, scoped, tag = 'output window, operand 0, single buffered']
    %8 = vsyncpa [#allocation4], 0
    %9 = vsyncpa [#allocation7], 0
    %10 = vsyncpa [#allocation5], 0
    // Predicated region
    $region2: #{tpu_custom_call.1} parent=1 // pred_check
      _
    $region3: #{tpu_custom_call.1} parent=1 // pred_check_branch
      %12 = sbr.rel (0) target = $region5
    $region4: #{tpu_custom_call.1} parent=1 // pred_region
      %s14 = ssub.s32 1280, 1280
      %15 = vsyncadd [#allocation4], %s14
      %s16 = sshll.u32 [#allocation3], 4
      %s17 = int_to_ptr.vmem [resolvable:$true] %s16
      %22 = dma.hbm_to_vmem [thread:$0]  %s0, 1280, %s17, [#allocation4], 128, 128, 8
    $region5: #{tpu_custom_call.1} parent=1 // pred_fallthru
      _
    // Predicated region
    $region6: #{tpu_custom_call.1} parent=1 // pred_check
      _
    $region7: #{tpu_custom_call.1} parent=1 // pred_check_branch
      %24 = sbr.rel (0) target = $region9
    $region8: #{tpu_custom_call.1} parent=1 // pred_region
      %s26 = ssub.s32 2048, 2048
      %27 = vsyncadd [#allocation7], %s26
      %s28 = sshll.u32 [#allocation6], 4
      %s29 = int_to_ptr.vmem [resolvable:$true] %s28
      %34 = dma.hbm_to_vmem [thread:$0]  %s1, 2048, %s29, [#allocation7], 64, 64, 4
    $region9: #{tpu_custom_call.1} parent=1 // pred_fallthru
      _
    // Predicated region
    $region10: #{tpu_custom_call.1} parent=1 // pred_check
      _
    $region11: #{tpu_custom_call.1} parent=1 // pred_check_branch
      %36 = sbr.rel (0) target = $region13
    $region12: #{tpu_custom_call.1} parent=1 // pred_region
      _
    $region13: #{tpu_custom_call.1} parent=1 // pred_fallthru
      _
    // Predicated region
    $region14: #{tpu_custom_call.1} parent=1 // pred_check
      _
    $region15: #{tpu_custom_call.1} parent=1 // pred_check_branch
      %38 = sbr.rel (0) target = $region17
    $region16: #{tpu_custom_call.1} parent=1 // pred_region
      %39 = dma.done [#allocation4], 1280
    $region17: #{tpu_custom_call.1} parent=1 // pred_fallthru
      _
    // Predicated region
    $region18: #{tpu_custom_call.1} parent=1 // pred_check
      _
    $region19: #{tpu_custom_call.1} parent=1 // pred_check_branch
      %41 = sbr.rel (0) target = $region21
    $region20: #{tpu_custom_call.1} parent=1 // pred_region
      %42 = dma.done [#allocation7], 2048
    $region21: #{tpu_custom_call.1} parent=1 // pred_fallthru
      _
    %p44 = scmp.eq.s32.totalorder 0, 0
    // Predicated region
    $region22: #{tpu_custom_call.1} parent=1 // pred_check
      %p45 = pneg %p44
    $region23: #{tpu_custom_call.1} parent=1 // pred_check_branch
      %47 = sbr.rel (%p45) target = $region25
    $region24: #{tpu_custom_call.1} parent=1 // pred_region
      %48 = vst [vmem:[#allocation2] sm:$0xff] 0.0
      %49 = vst [vmem:[#allocation2 + $0x8] sm:$0xff] 0.0
      %50 = vst [vmem:[#allocation2 + $0x10] sm:$0xff] 0.0
      %51 = vst [vmem:[#allocation2 + $0x18] sm:$0xff] 0.0
      %52 = vst [vmem:[#allocation2 + $0x20] sm:$0xff] 0.0
      %53 = vst [vmem:[#allocation2 + $0x28] sm:$0xff] 0.0
      %54 = vst [vmem:[#allocation2 + $0x30] sm:$0xff] 0.0
      %55 = vst [vmem:[#allocation2 + $0x38] sm:$0xff] 0.0
      %56 = vst [vmem:[#allocation2 + $0x40] sm:$0xff] 0.0
      %57 = vst [vmem:[#allocation2 + $0x48] sm:$0xff] 0.0
    $region25: #{tpu_custom_call.1} parent=1 // pred_fallthru
      _
    %v58 = vld [vmem:[#allocation2] sm:$0xff]
    %v59 = vld [vmem:[#allocation2 + $0x8] sm:$0xff]
    %v60 = vld [vmem:[#allocation2 + $0x10] sm:$0xff]
    %v61 = vld [vmem:[#allocation2 + $0x18] sm:$0xff]
    %v62 = vld [vmem:[#allocation2 + $0x20] sm:$0xff]
    %v63 = vld [vmem:[#allocation2 + $0x28] sm:$0xff]
    %v64 = vld [vmem:[#allocation2 + $0x30] sm:$0xff]
    %v65 = vld [vmem:[#allocation2 + $0x38] sm:$0xff]
    %v66 = vld [vmem:[#allocation2 + $0x40] sm:$0xff]
    %v67 = vld [vmem:[#allocation2 + $0x48] sm:$0xff]
    %v68 = vld [vmem:[#allocation3] sm:$0xff]
    %v69 = vld [vmem:[#allocation3 + $0x8] sm:$0xff]
    %v70 = vld [vmem:[#allocation3 + $0x10] sm:$0xff]
    %v71 = vld [vmem:[#allocation3 + $0x18] sm:$0xff]
    %v72 = vld [vmem:[#allocation3 + $0x20] sm:$0xff]
    %v73 = vld [vmem:[#allocation3 + $0x28] sm:$0xff]
    %v74 = vld [vmem:[#allocation3 + $0x30] sm:$0xff]
    %v75 = vld [vmem:[#allocation3 + $0x38] sm:$0xff]
    %v76 = vld [vmem:[#allocation3 + $0x40] sm:$0xff]
    %v77 = vld [vmem:[#allocation3 + $0x48] sm:$0xff]
    %v78 = vld [vmem:[#allocation6] sm:$0xf]
    %v79 = vld [vmem:[#allocation6 + $0x4] sm:$0xf]
    %v80 = vld [vmem:[#allocation6 + $0x8] sm:$0xf]
    %v81 = vld [vmem:[#allocation6 + $0xc] sm:$0xf]
    %v82 = vld [vmem:[#allocation6 + $0x10] sm:$0xf]
    %v83 = vld [vmem:[#allocation6 + $0x14] sm:$0xf]
    %v84 = vld [vmem:[#allocation6 + $0x18] sm:$0xf]
    %v85 = vld [vmem:[#allocation6 + $0x1c] sm:$0xf]
    %v86 = vld [vmem:[#allocation6 + $0x20] sm:$0xf]
    %v87 = vld [vmem:[#allocation6 + $0x24] sm:$0xf]
    %v88 = vld [vmem:[#allocation6 + $0x28] sm:$0xf]
    %v89 = vld [vmem:[#allocation6 + $0x2c] sm:$0xf]
    %v90 = vld [vmem:[#allocation6 + $0x30] sm:$0xf]
    %v91 = vld [vmem:[#allocation6 + $0x34] sm:$0xf]
    %v92 = vld [vmem:[#allocation6 + $0x38] sm:$0xf]
    %v93 = vld [vmem:[#allocation6 + $0x3c] sm:$0xf]
    %v94 = vld [vmem:[#allocation6 + $0x40] sm:$0xf]
    %v95 = vld [vmem:[#allocation6 + $0x44] sm:$0xf]
    %v96 = vld [vmem:[#allocation6 + $0x48] sm:$0xf]
    %v97 = vld [vmem:[#allocation6 + $0x4c] sm:$0xf]
    %v98 = vld [vmem:[#allocation6 + $0x50] sm:$0xf]
    %v99 = vld [vmem:[#allocation6 + $0x54] sm:$0xf]
    %v100 = vld [vmem:[#allocation6 + $0x58] sm:$0xf]
    %v101 = vld [vmem:[#allocation6 + $0x5c] sm:$0xf]
    %v102 = vld [vmem:[#allocation6 + $0x60] sm:$0xf]
    %v103 = vld [vmem:[#allocation6 + $0x64] sm:$0xf]
    %v104 = vld [vmem:[#allocation6 + $0x68] sm:$0xf]
    %v105 = vld [vmem:[#allocation6 + $0x6c] sm:$0xf]
    %v106 = vld [vmem:[#allocation6 + $0x70] sm:$0xf]
    %v107 = vld [vmem:[#allocation6 + $0x74] sm:$0xf]
    %v108 = vld [vmem:[#allocation6 + $0x78] sm:$0xf]
    %v109 = vld [vmem:[#allocation6 + $0x7c] sm:$0xf]
    %v120 = vunpack.c.l.b16 %v68
    %v121 = vunpack.c.h.b16 %v68
    %v122 = vunpack.c.l.b16 %v69
    %v123 = vunpack.c.h.b16 %v69
    %v124 = vunpack.c.l.b16 %v70
    %v125 = vunpack.c.h.b16 %v70
    %v126 = vunpack.c.l.b16 %v71
    %v127 = vunpack.c.h.b16 %v71
    %v128 = vunpack.c.l.b16 %v72
    %v129 = vunpack.c.h.b16 %v72
    %v130 = vunpack.c.l.b16 %v73
    %v131 = vunpack.c.h.b16 %v73
    %v132 = vunpack.c.l.b16 %v74
    %v133 = vunpack.c.h.b16 %v74
    %v134 = vunpack.c.l.b16 %v75
    %v135 = vunpack.c.h.b16 %v75
    %v136 = vunpack.c.l.b16 %v76
    %v137 = vunpack.c.h.b16 %v76
    %v138 = vunpack.c.l.b16 %v77
    %v139 = vunpack.c.h.b16 %v77
    %v140 = vpack.c.b16 %v122, %v120
    %v141 = vpack.c.b16 %v123, %v121
    %v142 = vpack.c.b16 %v126, %v124
    %v143 = vpack.c.b16 %v127, %v125
    %v144 = vpack.c.b16 %v130, %v128
    %v145 = vpack.c.b16 %v131, %v129
    %v146 = vpack.c.b16 %v134, %v132
    %v147 = vpack.c.b16 %v135, %v133
    %v148 = vpack.c.b16 %v138, %v136
    %v149 = vpack.c.b16 %v139, %v137
    %v192 = vunpack.c.l.b16 %v78
    %v193 = vunpack.c.l.b16 %v79
    %v194 = vunpack.c.l.b16 %v80
    %v195 = vunpack.c.l.b16 %v81
    %v196 = vunpack.c.l.b16 %v82
    %v197 = vunpack.c.l.b16 %v83
    %v198 = vunpack.c.l.b16 %v84
    %v199 = vunpack.c.l.b16 %v85
    %v200 = vunpack.c.l.b16 %v86
    %v201 = vunpack.c.l.b16 %v87
    %v202 = vunpack.c.l.b16 %v88
    %v203 = vunpack.c.l.b16 %v89
    %v204 = vunpack.c.l.b16 %v90
    %v205 = vunpack.c.l.b16 %v91
    %v206 = vunpack.c.l.b16 %v92
    %v207 = vunpack.c.l.b16 %v93
    %v208 = vunpack.c.l.b16 %v94
    %v209 = vunpack.c.l.b16 %v95
    %v210 = vunpack.c.l.b16 %v96
    %v211 = vunpack.c.l.b16 %v97
    %v212 = vunpack.c.l.b16 %v98
    %v213 = vunpack.c.l.b16 %v99
    %v214 = vunpack.c.l.b16 %v100
    %v215 = vunpack.c.l.b16 %v101
    %v216 = vunpack.c.l.b16 %v102
    %v217 = vunpack.c.l.b16 %v103
    %v218 = vunpack.c.l.b16 %v104
    %v219 = vunpack.c.l.b16 %v105
    %v220 = vunpack.c.l.b16 %v106
    %v221 = vunpack.c.l.b16 %v107
    %v222 = vunpack.c.l.b16 %v108
    %v223 = vunpack.c.l.b16 %v109
    %v224 = vpack.c.b16 %v193, %v192
    %v225 = vpack.c.b16 %v195, %v194
    %v226 = vpack.c.b16 %v197, %v196
    %v227 = vpack.c.b16 %v199, %v198
    %v228 = vpack.c.b16 %v201, %v200
    %v229 = vpack.c.b16 %v203, %v202
    %v230 = vpack.c.b16 %v205, %v204
    %v231 = vpack.c.b16 %v207, %v206
    %v232 = vpack.c.b16 %v209, %v208
    %v233 = vpack.c.b16 %v211, %v210
    %v234 = vpack.c.b16 %v213, %v212
    %v235 = vpack.c.b16 %v215, %v214
    %v236 = vpack.c.b16 %v217, %v216
    %v237 = vpack.c.b16 %v219, %v218
    %v238 = vpack.c.b16 %v221, %v220
    %v239 = vpack.c.b16 %v223, %v222
    %256 = vmatprep.subr.bf16.mxu0 0
    %257 = vmatpush1.bf16.msra.mxu0 %v224
    %258 = vmatprep.subr.bf16.mxu0 0
    %259 = vmatpush1.bf16.msra.mxu0 %v225
    %260 = vmatprep.subr.bf16.mxu0 0
    %261 = vmatpush1.bf16.msra.mxu0 %v226
    %262 = vmatprep.subr.bf16.mxu0 0
    %263 = vmatpush1.bf16.msra.mxu0 %v227
    %264 = vmatprep.subr.bf16.mxu0 0
    %265 = vmatpush1.bf16.msra.mxu0 %v228
    %266 = vmatprep.subr.bf16.mxu0 0
    %267 = vmatpush1.bf16.msra.mxu0 %v229
    %268 = vmatprep.subr.bf16.mxu0 0
    %269 = vmatpush1.bf16.msra.mxu0 %v230
    %270 = vmatprep.subr.bf16.mxu0 0
    %271 = vmatpush1.bf16.msra.mxu0 %v231
    %272 = vmatprep.subr.bf16.mxu0 0
    %273 = vmatpush1.bf16.msra.mxu0 %v232
    %274 = vmatprep.subr.bf16.mxu0 0
    %275 = vmatpush1.bf16.msra.mxu0 %v233
    %276 = vmatprep.subr.bf16.mxu0 0
    %277 = vmatpush1.bf16.msra.mxu0 %v234
    %278 = vmatprep.subr.bf16.mxu0 0
    %279 = vmatpush1.bf16.msra.mxu0 %v235
    %280 = vmatprep.subr.bf16.mxu0 0
    %281 = vmatpush1.bf16.msra.mxu0 %v236
    %282 = vmatprep.subr.bf16.mxu0 0
    %283 = vmatpush1.bf16.msra.mxu0 %v237
    %284 = vmatprep.subr.bf16.mxu0 0
    %285 = vmatpush1.bf16.msra.mxu0 %v238
    %286 = vmatprep.subr.bf16.mxu0 0
    %287 = vmatpush1.bf16.msra.mxu0 %v239
    %288 = vmatprep.mubr.bf16.mxu0 %v141
    %289 = vmatmul.mubr.bf16.gmra.mrb[0].mxu0 %v140
    %v290 = vpop.f32.mrb[0].mxu0
    %v291 = vadd.f32 0.0, %v290
    %v292 = vpop.f32.mrb[0].mxu0
    %v293 = vpop.f32.mrb[0].mxu0
    %v294 = vadd.f32 0.0, %v293
    %v295 = vpop.f32.mrb[0].mxu0
    %296 = vmatprep.mubr.bf16.mxu0 %v143
    %297 = vmatmul.mubr.bf16.gmra.mrb[0].mxu0 %v142
    %v298 = vpop.f32.mrb[0].mxu0
    %v299 = vadd.f32 0.0, %v298
    %v300 = vpop.f32.mrb[0].mxu0
    %v301 = vpop.f32.mrb[0].mxu0
    %v302 = vadd.f32 0.0, %v301
    %v303 = vpop.f32.mrb[0].mxu0
    %304 = vmatprep.mubr.bf16.mxu0 %v145
    %305 = vmatmul.mubr.bf16.gmra.mrb[0].mxu0 %v144
    %v306 = vpop.f32.mrb[0].mxu0
    %v307 = vadd.f32 0.0, %v306
    %v308 = vpop.f32.mrb[0].mxu0
    %v309 = vpop.f32.mrb[0].mxu0
    %v310 = vadd.f32 0.0, %v309
    %v311 = vpop.f32.mrb[0].mxu0
    %312 = vmatprep.mubr.bf16.mxu0 %v147
    %313 = vmatmul.mubr.bf16.gmra.mrb[0].mxu0 %v146
    %v314 = vpop.f32.mrb[0].mxu0
    %v315 = vadd.f32 0.0, %v314
    %v316 = vpop.f32.mrb[0].mxu0
    %v317 = vpop.f32.mrb[0].mxu0
    %v318 = vadd.f32 0.0, %v317
    %v319 = vpop.f32.mrb[0].mxu0
    %320 = vmatprep.mubr.bf16.mxu0 %v149
    %321 = vmatmul.mubr.bf16.gmra.mrb[0].mxu0 %v148
    %v322 = vpop.f32.mrb[0].mxu0
    %v323 = vadd.f32 0.0, %v322
    %v324 = vpop.f32.mrb[0].mxu0
    %v325 = vpop.f32.mrb[0].mxu0
    %v326 = vadd.f32 0.0, %v325
    %v327 = vpop.f32.mrb[0].mxu0
    %328 = vdwg.mxu0
    %v329 = vadd.f32 %v58, %v291
    %v330 = vadd.f32 %v59, %v294
    %v331 = vadd.f32 %v60, %v299
    %v332 = vadd.f32 %v61, %v302
    %v333 = vadd.f32 %v62, %v307
    %v334 = vadd.f32 %v63, %v310
    %v335 = vadd.f32 %v64, %v315
    %v336 = vadd.f32 %v65, %v318
    %v337 = vadd.f32 %v66, %v323
    %v338 = vadd.f32 %v67, %v326
    %339 = vst [vmem:[#allocation2] sm:$0xff] %v329
    %340 = vst [vmem:[#allocation2 + $0x8] sm:$0xff] %v330
    %341 = vst [vmem:[#allocation2 + $0x10] sm:$0xff] %v331
    %342 = vst [vmem:[#allocation2 + $0x18] sm:$0xff] %v332
    %343 = vst [vmem:[#allocation2 + $0x20] sm:$0xff] %v333
    %344 = vst [vmem:[#allocation2 + $0x28] sm:$0xff] %v334
    %345 = vst [vmem:[#allocation2 + $0x30] sm:$0xff] %v335
    %346 = vst [vmem:[#allocation2 + $0x38] sm:$0xff] %v336
    %347 = vst [vmem:[#allocation2 + $0x40] sm:$0xff] %v337
    %348 = vst [vmem:[#allocation2 + $0x48] sm:$0xff] %v338
    // Predicated region
    $region26: #{tpu_custom_call.1} parent=1 // pred_check
      %p349 = pneg %p44
    $region27: #{tpu_custom_call.1} parent=1 // pred_check_branch
      %351 = sbr.rel (%p349) target = $region29
    $region28: #{tpu_custom_call.1} parent=1 // pred_region
      %v352 = vld [vmem:[#allocation2] sm:$0xff]
      %v353 = vld [vmem:[#allocation2 + $0x8] sm:$0xff]
      %v354 = vld [vmem:[#allocation2 + $0x10] sm:$0xff]
      %v355 = vld [vmem:[#allocation2 + $0x18] sm:$0xff]
      %v356 = vld [vmem:[#allocation2 + $0x20] sm:$0xff]
      %v357 = vld [vmem:[#allocation2 + $0x28] sm:$0xff]
      %v358 = vld [vmem:[#allocation2 + $0x30] sm:$0xff]
      %v359 = vld [vmem:[#allocation2 + $0x38] sm:$0xff]
      %v360 = vld [vmem:[#allocation2 + $0x40] sm:$0xff]
      %v361 = vld [vmem:[#allocation2 + $0x48] sm:$0xff]
      %v362 = vld [vmem:[%s2] sm:$0x1]
      %v364 = vlaneseq
      %v365 = vshrl.u32 %v364, 7
      %v366 = vsub.s32 0, %v365
      %v367 = vrot.slane %v362, %v366
      %v369 = vadd.f32 %v352, %v367
      %v370 = vadd.f32 %v353, %v367
      %v371 = vadd.f32 %v354, %v367
      %v372 = vadd.f32 %v355, %v367
      %v373 = vadd.f32 %v356, %v367
      %v374 = vadd.f32 %v357, %v367
      %v375 = vadd.f32 %v358, %v367
      %v376 = vadd.f32 %v359, %v367
      %v377 = vadd.f32 %v360, %v367
      %v378 = vadd.f32 %v361, %v367
      %v379 = vmax.f32 %v369, 0.0
      %v380 = vmax.f32 %v370, 0.0
      %v381 = vmax.f32 %v371, 0.0
      %v382 = vmax.f32 %v372, 0.0
      %v383 = vmax.f32 %v373, 0.0
      %v384 = vmax.f32 %v374, 0.0
      %v385 = vmax.f32 %v375, 0.0
      %v386 = vmax.f32 %v376, 0.0
      %v387 = vmax.f32 %v377, 0.0
      %v388 = vmax.f32 %v378, 0.0
      %v389 = vpack.c.bf16 %v380, %v379
      %v390 = vpack.c.bf16 %v382, %v381
      %v391 = vpack.c.bf16 %v384, %v383
      %v392 = vpack.c.bf16 %v386, %v385
      %v393 = vpack.c.bf16 %v388, %v387
      %v399 = vunpack.c.l.b16 %v389
      %v400 = vunpack.c.h.b16 %v389
      %v401 = vunpack.c.l.b16 %v390
      %v402 = vunpack.c.h.b16 %v390
      %v403 = vunpack.c.l.b16 %v391
      %v404 = vunpack.c.h.b16 %v391
      %v405 = vunpack.c.l.b16 %v392
      %v406 = vunpack.c.h.b16 %v392
      %v407 = vunpack.c.l.b16 %v393
      %v408 = vunpack.c.h.b16 %v393
      %v409 = vpack.c.b16 %v399, %v399
      %v410 = vpack.c.b16 %v400, %v400
      %v411 = vpack.c.b16 %v401, %v401
      %v412 = vpack.c.b16 %v402, %v402
      %v413 = vpack.c.b16 %v403, %v403
      %v414 = vpack.c.b16 %v404, %v404
      %v415 = vpack.c.b16 %v405, %v405
      %v416 = vpack.c.b16 %v406, %v406
      %v417 = vpack.c.b16 %v407, %v407
      %v418 = vpack.c.b16 %v408, %v408
      %429 = vst [vmem:[#allocation8] sm:$0xf] %v409
      %430 = vst [vmem:[#allocation8 + $0x4] sm:$0xf] %v410
      %431 = vst [vmem:[#allocation8 + $0x8] sm:$0xf] %v411
      %432 = vst [vmem:[#allocation8 + $0xc] sm:$0xf] %v412
      %433 = vst [vmem:[#allocation8 + $0x10] sm:$0xf] %v413
      %434 = vst [vmem:[#allocation8 + $0x14] sm:$0xf] %v414
      %435 = vst [vmem:[#allocation8 + $0x18] sm:$0xf] %v415
      %436 = vst [vmem:[#allocation8 + $0x1c] sm:$0xf] %v416
      %437 = vst [vmem:[#allocation8 + $0x20] sm:$0xf] %v417
      %438 = vst [vmem:[#allocation8 + $0x24] sm:$0xf] %v418
    $region29: #{tpu_custom_call.1} parent=1 // pred_fallthru
      _
    // Predicated region
    $region30: #{tpu_custom_call.1} parent=1 // pred_check
      _
    $region31: #{tpu_custom_call.1} parent=1 // pred_check_branch
      %440 = sbr.rel (0) target = $region33
    $region32: #{tpu_custom_call.1} parent=1 // pred_region
      %s442 = ssub.s32 640, 640
      %443 = vsyncadd [#allocation5], %s442
      %s444 = sshll.u32 [#allocation8], 4
      %s445 = int_to_ptr.vmem [resolvable:$true] %s444
      %450 = dma.vmem_to_hbm [thread:$0]  %s445, 640, %s3, [#allocation5], 64, 64, 4
    $region33: #{tpu_custom_call.1} parent=1 // pred_fallthru
      _
    // Predicated region
    $region34: #{tpu_custom_call.1} parent=1 // pred_check
      _
    $region35: #{tpu_custom_call.1} parent=1 // pred_check_branch
      %452 = sbr.rel (0) target = $region37
    $region36: #{tpu_custom_call.1} parent=1 // pred_region
      %453 = dma.done [#allocation5], 640
    $region37: #{tpu_custom_call.1} parent=1 // pred_fallthru
      _
    %454 = vsyncpa [#allocation4], 1
    %455 = vsyncpa [#allocation7], 1
    %456 = vsyncpa [#allocation5], 1

</llo_original>
